<compile_context>
chip_gen: v6e
topology: v6e:2x2x1
jax: 0.10.0
libtpu: 0.0.40
codegen_flags: <defaults>
</compile_context>

<pallas_src>
import math

import jax
import jax.numpy as jnp
from jax.experimental import pallas as pl
from jax.experimental.pallas import tpu as pltpu


def _round_up(x, m):
    return ((x + m - 1) // m) * m


def _cdiv(a, b):
    return (a + b - 1) // b


# -----------------------------------------------------------------------------
# Kernel
# -----------------------------------------------------------------------------
def timestep_embedding_kernel(t_ref, freq_ref, phase_ref, w1_ref, b1_ref,
                              w2_ref, b2_ref, o_ref):
    """Fused sinusoidal embedding -> Linear -> SiLU -> Linear for one batch tile.

    t_ref     : (TB, 1)  f32   timestep tile
    freq_ref  : (1, K)   f32   [inv_freq | inv_freq]          (K = 2*half)
    phase_ref : (1, K)   f32   [0 ... 0  | pi/2 ... pi/2]
    w1_ref    : (K, H)   bf16  packed W1: [sin rows ; cos rows]
    b1_ref    : (1, H)   f32
    w2_ref    : (H, H)   bf16
    b2_ref    : (1, H)   f32
    o_ref     : (TB, H)  out dtype
    """
    t = t_ref[...]                                           # (TB, 1) f32
    # cos(x) = sin(x + pi/2): one lane-dense sinusoid covers both halves.
    emb = jnp.sin(t * freq_ref[...] + phase_ref[...])        # (TB, K) f32, EUP

    # Single K-deep bf16 matmul (f32 accumulate) replaces two K/2 matmuls.
    h = jnp.dot(emb.astype(w1_ref.dtype), w1_ref[...],
                preferred_element_type=jnp.float32) + b1_ref[...]
    h = h * jax.nn.sigmoid(h)                                # SiLU, f32 VPU/EUP

    out = jnp.dot(h.astype(w2_ref.dtype), w2_ref[...],
                  preferred_element_type=jnp.float32) + b2_ref[...]
    o_ref[...] = out.astype(o_ref.dtype)


# -----------------------------------------------------------------------------
# Wrapper
# -----------------------------------------------------------------------------
def _choose_batch_tile(B, block_b):
    """Pick the batch tile: as large as possible, but keep >=2 grid steps when
    B > 8 so the parallel axis shards across v7x's two TensorCores."""
    b8 = _round_up(max(B, 1), 8)
    tb = min(_round_up(max(block_b, 8), 8), b8)
    if _cdiv(b8, tb) < 2 and b8 > 8:
        tb = max(8, _round_up(_cdiv(B, 2), 8))
    return tb


def timestep_embedding(t, w1, b1, w2, b2, *, time_emb_dim=None, block_b=256,
                       weight_dtype=jnp.bfloat16, out_dtype=jnp.float32):
    """t: (B,) f32 timesteps -> (B, hidden_dim) embedding.

    Weights are in (in_features, out_features) layout, i.e. the kernel computes
    x @ W + b (equivalent to PyTorch's x @ W.T with W of shape (out, in)).
    """
    if time_emb_dim is None:
        time_emb_dim = w1.shape[0]
    B = t.shape[0]
    hidden_dim = w2.shape[1]
    half = (time_emb_dim + 1) // 2
    K = 2 * half

    # ---- host-side (trace-time) precompute ---------------------------------
    i = jnp.arange(half, dtype=jnp.float32)
    inv_freq = 1.0 / jnp.exp(math.log(10000.0) * (2.0 * i / float(time_emb_dim)))
    freq_full = jnp.concatenate([inv_freq, inv_freq]).reshape(1, K)
    phase = jnp.concatenate(
        [jnp.zeros((half,), jnp.float32),
         jnp.full((half,), 0.5 * math.pi, jnp.float32)]).reshape(1, K)

    # Interleaved [sin, cos, sin, cos, ...] @ W1  ==  [sin-block | cos-block] @ W1_packed
    w1_sin = w1[0::2, :]                                     # (half, H)
    w1_cos = w1[1::2, :]                                     # (dim//2, H)
    if w1_cos.shape[0] < half:                               # odd dim: truncated cos col
        w1_cos = jnp.concatenate(
            [w1_cos, jnp.zeros((half - w1_cos.shape[0], hidden_dim), w1_cos.dtype)],
            axis=0)
    w1_packed = jnp.concatenate([w1_sin, w1_cos], axis=0).astype(weight_dtype)  # (K, H)
    w2_c = w2.astype(weight_dtype)
    b1_2d = b1.reshape(1, hidden_dim).astype(jnp.float32)
    b2_2d = b2.reshape(1, hidden_dim).astype(jnp.float32)

    # ---- batch tiling (grid over batch, weights resident) ------------------
    tb = _choose_batch_tile(B, block_b)
    b_pad = _round_up(B, tb)
    t2d = t.reshape(B, 1).astype(jnp.float32)
    if b_pad != B:
        t2d = jnp.pad(t2d, ((0, b_pad - B), (0, 0)))
    grid = (b_pad // tb,)

    # ---- explicit VMEM budget (double-buffered blocks + intermediates) -----
    wbytes = jnp.dtype(weight_dtype).itemsize
    obytes = jnp.dtype(out_dtype).itemsize
    resident_bytes = (2 * K * 4                              # freq + phase
                      + K * hidden_dim * wbytes              # packed W1
                      + 2 * hidden_dim * 4                   # b1 + b2
                      + hidden_dim * hidden_dim * wbytes)    # W2
    tile_bytes = tb * 4 + tb * hidden_dim * obytes           # t tile + out tile
    interm_bytes = tb * K * 6 + tb * hidden_dim * 10         # emb/h + bf16 casts
    vmem_limit = int(min(48 << 20,
                         max(4 << 20,
                             2 * (2 * resident_bytes + 2 * tile_bytes)
                             + 2 * interm_bytes)))

    resident = lambda i: (0, 0)
    out = pl.pallas_call(
        timestep_embedding_kernel,
        out_shape=jax.ShapeDtypeStruct((b_pad, hidden_dim), out_dtype),
        grid=grid,
        in_specs=[
            pl.BlockSpec((tb, 1), lambda i: (i, 0)),             # t tile
            pl.BlockSpec((1, K), resident),                      # inv_freq (doubled)
            pl.BlockSpec((1, K), resident),                      # phase
            pl.BlockSpec((K, hidden_dim), resident),             # packed W1
            pl.BlockSpec((1, hidden_dim), resident),             # b1
            pl.BlockSpec((hidden_dim, hidden_dim), resident),    # W2
            pl.BlockSpec((1, hidden_dim), resident),             # b2
        ],
        out_specs=pl.BlockSpec((tb, hidden_dim), lambda i: (i, 0)),
        compiler_params=pltpu.CompilerParams(
            dimension_semantics=("parallel",),
            vmem_limit_bytes=vmem_limit),
    )(t2d, freq_full, phase, w1_packed, b1_2d, w2_c, b2_2d)

    return out[:B]


# -----------------------------------------------------------------------------
# Init + references
# -----------------------------------------------------------------------------
def init_params(key, time_emb_dim, hidden_dim):
    """nn.Linear-style uniform(-1/sqrt(fan_in), 1/sqrt(fan_in)) init."""
    k1, k2, k3, k4 = jax.random.split(key, 4)
    bound1 = 1.0 / math.sqrt(time_emb_dim)
    bound2 = 1.0 / math.sqrt(hidden_dim)
    w1 = jax.random.uniform(k1, (time_emb_dim, hidden_dim), jnp.float32, -bound1, bound1)
    b1 = jax.random.uniform(k2, (hidden_dim,), jnp.float32, -bound1, bound1)
    w2 = jax.random.uniform(k3, (hidden_dim, hidden_dim), jnp.float32, -bound2, bound2)
    b2 = jax.random.uniform(k4, (hidden_dim,), jnp.float32, -bound2, bound2)
    return w1, b1, w2, b2


def _sinusoidal(t, dim):
    """Faithful port of SinusoidalTimeEmbedding.forward (division by exp(+...))."""
    half = (dim + 1) // 2
    i = jnp.arange(half, dtype=jnp.float32)
    freq = jnp.exp(math.log(10000.0) * (2.0 * i / dim))
    arg = t[:, None] / freq
    emb = jnp.stack([jnp.sin(arg), jnp.cos(arg)], axis=-1).reshape(t.shape[0], -1)
    return emb[:, :dim]


def reference_f32(t, w1, b1, w2, b2, dim):
    """Pure-f32 JAX reference mirroring the PyTorch module."""
    emb = _sinusoidal(t, dim)
    h = emb @ w1 + b1
    h = h * jax.nn.sigmoid(h)
    return h @ w2 + b2


def reference_bf16_matched(t, w1, b1, w2, b2, dim, weight_dtype=jnp.bfloat16):
    """Reference with the same arithmetic order (t * inv_freq) and bf16-operand /
    f32-accumulate matmuls as the kernel."""
    half = (dim + 1) // 2
    i = jnp.arange(half, dtype=jnp.float32)
    inv_freq = 1.0 / jnp.exp(math.log(10000.0) * (2.0 * i / dim))
    arg = t[:, None] * inv_freq
    emb = jnp.stack([jnp.sin(arg), jnp.cos(arg)], axis=-1).reshape(t.shape[0], -1)
    emb = emb[:, :dim]
    h = jnp.dot(emb.astype(weight_dtype), w1.astype(weight_dtype),
                preferred_element_type=jnp.float32) + b1
    h = h * jax.nn.sigmoid(h)
    return jnp.dot(h.astype(weight_dtype), w2.astype(weight_dtype),
                   preferred_element_type=jnp.float32) + b2


# -----------------------------------------------------------------------------
if __name__ == "__main__":
    batch = 16
    time_emb_dim = 128     # module default
    hidden_dim = 128       # module default; lane-dense output

    key = jax.random.PRNGKey(0)
    kt, kp = jax.random.split(key)
    t = jax.random.uniform(kt, (batch,), jnp.float32, 0.0, 1000.0)
    w1, b1, w2, b2 = init_params(kp, time_emb_dim, hidden_dim)

    out = timestep_embedding(t, w1, b1, w2, b2, time_emb_dim=time_emb_dim)
    out = jax.block_until_ready(out)
    assert out.shape == (batch, hidden_dim)
    assert out.dtype == jnp.float32

    # Tight check against a reference with matched bf16-operand matmuls, plus a
    # looser semantic check against the pure-f32 PyTorch-equivalent (accounts
    # for bf16 weight quantization).
    ref_m = reference_bf16_matched(t, w1, b1, w2, b2, time_emb_dim)
    ref_f = reference_f32(t, w1, b1, w2, b2, time_emb_dim)
    assert jnp.allclose(out, ref_m, atol=5e-3, rtol=5e-3), "mismatch vs bf16-matched reference"
    assert jnp.allclose(out, ref_f, atol=5e-2, rtol=5e-2), "mismatch vs f32 reference"

    print("KERNEL_OK")
</pallas_src>

<mosaic_0001>
module attributes {stable_mosaic.version = 11 : i64} {
  func.func @timestep_embedding_kernel(%arg0: i32, %arg1: memref<8x1xf32, #tpu.memory_space<vmem>>, %arg2: memref<1x128xf32, #tpu.memory_space<vmem>>, %arg3: memref<1x128xf32, #tpu.memory_space<vmem>>, %arg4: memref<128x128xbf16, #tpu.memory_space<vmem>>, %arg5: memref<1x128xf32, #tpu.memory_space<vmem>>, %arg6: memref<128x128xbf16, #tpu.memory_space<vmem>>, %arg7: memref<1x128xf32, #tpu.memory_space<vmem>>, %arg8: memref<8x128xf32, #tpu.memory_space<vmem>>) attributes {dimension_semantics = [#tpu.dimension_semantics<parallel>], iteration_bounds = array<i64: 2>, scalar_prefetch = 0 : i64, scratch_operands = 0 : i64, tpu.core_type = #tpu.core_type<tc>, window_params = [{transform_indices = @transform_0, window_bounds = array<i64: 8, 1>}, {pipeline_mode = #tpu.pipeline_mode<synchronous>, transform_indices = @transform_1, window_bounds = array<i64: 1, 128>}, {pipeline_mode = #tpu.pipeline_mode<synchronous>, transform_indices = @transform_2, window_bounds = array<i64: 1, 128>}, {pipeline_mode = #tpu.pipeline_mode<synchronous>, transform_indices = @transform_3, window_bounds = array<i64: 128, 128>}, {pipeline_mode = #tpu.pipeline_mode<synchronous>, transform_indices = @transform_4, window_bounds = array<i64: 1, 128>}, {pipeline_mode = #tpu.pipeline_mode<synchronous>, transform_indices = @transform_5, window_bounds = array<i64: 128, 128>}, {pipeline_mode = #tpu.pipeline_mode<synchronous>, transform_indices = @transform_6, window_bounds = array<i64: 1, 128>}, {transform_indices = @transform_7, window_bounds = array<i64: 8, 128>}]} {
    %c0 = arith.constant 0 : index
    %c0_0 = arith.constant 0 : index
    %0 = vector.load %arg1[%c0, %c0_0] : memref<8x1xf32, #tpu.memory_space<vmem>>, vector<8x1xf32>
    %c0_1 = arith.constant 0 : index
    %c0_2 = arith.constant 0 : index
    %1 = vector.load %arg2[%c0_1, %c0_2] : memref<1x128xf32, #tpu.memory_space<vmem>>, vector<1x128xf32>
    %2 = vector.broadcast %0 : vector<8x1xf32> to vector<8x128xf32>
    %3 = vector.broadcast %1 : vector<1x128xf32> to vector<8x128xf32>
    %4 = arith.mulf %2, %3 : vector<8x128xf32>
    %c0_3 = arith.constant 0 : index
    %c0_4 = arith.constant 0 : index
    %5 = vector.load %arg3[%c0_3, %c0_4] : memref<1x128xf32, #tpu.memory_space<vmem>>, vector<1x128xf32>
    %6 = vector.broadcast %5 : vector<1x128xf32> to vector<8x128xf32>
    %7 = arith.addf %4, %6 : vector<8x128xf32>
    %8 = math.sin %7 : vector<8x128xf32>
    %9 = arith.truncf %8 : vector<8x128xf32> to vector<8x128xbf16>
    %c0_5 = arith.constant 0 : index
    %c0_6 = arith.constant 0 : index
    %10 = vector.load %arg4[%c0_5, %c0_6] : memref<128x128xbf16, #tpu.memory_space<vmem>>, vector<128x128xbf16>
    %cst = arith.constant dense<0.000000e+00> : vector<8x128xf32>
    %11 = tpu.matmul %9, %10, %cst {dimension_numbers = #tpu.dot_dimension_numbers<[1], [0], [0], [1], [0, 0, 1, 1], [], []>} : vector<8x128xbf16>, vector<128x128xbf16>, vector<8x128xf32> -> vector<8x128xf32>
    %c0_7 = arith.constant 0 : index
    %c0_8 = arith.constant 0 : index
    %12 = vector.load %arg5[%c0_7, %c0_8] : memref<1x128xf32, #tpu.memory_space<vmem>>, vector<1x128xf32>
    %13 = vector.broadcast %12 : vector<1x128xf32> to vector<8x128xf32>
    %14 = arith.addf %11, %13 : vector<8x128xf32>
    %15 = arith.negf %14 : vector<8x128xf32>
    %16 = math.exp %15 : vector<8x128xf32>
    %cst_9 = arith.constant 1.000000e+00 : f32
    %17 = vector.broadcast %cst_9 : f32 to vector<8x128xf32>
    %18 = arith.addf %17, %16 : vector<8x128xf32>
    %19 = arith.divf %17, %18 : vector<8x128xf32>
    %20 = arith.mulf %14, %19 : vector<8x128xf32>
    %21 = arith.truncf %20 : vector<8x128xf32> to vector<8x128xbf16>
    %c0_10 = arith.constant 0 : index
    %c0_11 = arith.constant 0 : index
    %22 = vector.load %arg6[%c0_10, %c0_11] : memref<128x128xbf16, #tpu.memory_space<vmem>>, vector<128x128xbf16>
    %cst_12 = arith.constant dense<0.000000e+00> : vector<8x128xf32>
    %23 = tpu.matmul %21, %22, %cst_12 {dimension_numbers = #tpu.dot_dimension_numbers<[1], [0], [0], [1], [0, 0, 1, 1], [], []>} : vector<8x128xbf16>, vector<128x128xbf16>, vector<8x128xf32> -> vector<8x128xf32>
    %c0_13 = arith.constant 0 : index
    %c0_14 = arith.constant 0 : index
    %24 = vector.load %arg7[%c0_13, %c0_14] : memref<1x128xf32, #tpu.memory_space<vmem>>, vector<1x128xf32>
    %25 = vector.broadcast %24 : vector<1x128xf32> to vector<8x128xf32>
    %26 = arith.addf %23, %25 : vector<8x128xf32>
    %c0_15 = arith.constant 0 : index
    %c0_16 = arith.constant 0 : index
    %27 = vector.load %arg8[%c0_15, %c0_16] : memref<8x128xf32, #tpu.memory_space<vmem>>, vector<8x128xf32>
    tpu.vector_store %arg8[%c0_15, %c0_16], %26 {strides = array<i32>} : memref<8x128xf32, #tpu.memory_space<vmem>>, vector<8x128xf32>,
    return
  }
  func.func @transform_0(%arg0: i32) -> (i32, i32) {
    %c0_i32 = arith.constant 0 : i32
    %c0_i32_0 = arith.constant 0 : i32
    return %arg0, %c0_i32 : i32, i32
  }
  func.func @transform_1(%arg0: i32) -> (i32, i32) {
    %c0_i32 = arith.constant 0 : i32
    %c0_i32_0 = arith.constant 0 : i32
    %c0_i32_1 = arith.constant 0 : i32
    return %c0_i32, %c0_i32_0 : i32, i32
  }
  func.func @transform_2(%arg0: i32) -> (i32, i32) {
    %c0_i32 = arith.constant 0 : i32
    %c0_i32_0 = arith.constant 0 : i32
    %c0_i32_1 = arith.constant 0 : i32
    return %c0_i32, %c0_i32_0 : i32, i32
  }
  func.func @transform_3(%arg0: i32) -> (i32, i32) {
    %c0_i32 = arith.constant 0 : i32
    %c0_i32_0 = arith.constant 0 : i32
    %c0_i32_1 = arith.constant 0 : i32
    return %c0_i32, %c0_i32_0 : i32, i32
  }
  func.func @transform_4(%arg0: i32) -> (i32, i32) {
    %c0_i32 = arith.constant 0 : i32
    %c0_i32_0 = arith.constant 0 : i32
    %c0_i32_1 = arith.constant 0 : i32
    return %c0_i32, %c0_i32_0 : i32, i32
  }
  func.func @transform_5(%arg0: i32) -> (i32, i32) {
    %c0_i32 = arith.constant 0 : i32
    %c0_i32_0 = arith.constant 0 : i32
    %c0_i32_1 = arith.constant 0 : i32
    return %c0_i32, %c0_i32_0 : i32, i32
  }
  func.func @transform_6(%arg0: i32) -> (i32, i32) {
    %c0_i32 = arith.constant 0 : i32
    %c0_i32_0 = arith.constant 0 : i32
    %c0_i32_1 = arith.constant 0 : i32
    return %c0_i32, %c0_i32_0 : i32, i32
  }
  func.func @transform_7(%arg0: i32) -> (i32, i32) {
    %c0_i32 = arith.constant 0 : i32
    %c0_i32_0 = arith.constant 0 : i32
    return %arg0, %c0_i32 : i32, i32
  }
}

</mosaic_0001>

<llo_original>
// kernel: tpu_custom_call.1
$region0: #{tpu_custom_call.1}
  #allocation0 [shape = 'u32[]', space=smem, size = 0x4, offset = 0x4, fixed_abs, tag = 'smem constant byte address 0x4 - core index']
  #allocation1 [shape = 'u32[144,128]{1,0:T(1,128)}', space=vmem, size = 0x12000, scoped, tag = 'internal scratch']
  %s0 = inlined_call_operand.vmem [shape: f32[16,1], index: 0, kind: input, shape index: {}]
  %s1 = inlined_call_operand.vmem [shape: f32[1,128], index: 1, kind: input, shape index: {}]
  %s2 = inlined_call_operand.vmem [shape: f32[1,128], index: 2, kind: input, shape index: {}]
  %s3 = inlined_call_operand.hbm [shape: bf16[128,128], index: 3, kind: input, shape index: {}]
  %s4 = inlined_call_operand.vmem [shape: f32[1,128], index: 4, kind: input, shape index: {}]
  %s5 = inlined_call_operand.hbm [shape: bf16[128,128], index: 5, kind: input, shape index: {}]
  %s6 = inlined_call_operand.vmem [shape: f32[1,128], index: 6, kind: input, shape index: {}]
  %s7 = inlined_call_operand.hbm [shape: f32[16,128], index: 7, kind: output, shape index: {}]
  %s8 = sld [smem:[#allocation0]]
  $region69: #{tpu_custom_call.1} parent=0
    _
  %s10 = ssub.s32 1, %s8
  %s11 = scalar_select 0, %s10, %s8
  $region1: #{tpu_custom_call.1} parent=0
    #allocation2 [shape = 'u8[32768]{0}', space=vmem, size = 0x8000, scoped, tag = 'input window, operand 3, single buffered']
    #allocation3 [shape = 's32[2]{0}', space=sflag, size = 0x8, scoped, tag = 'scoped memory for tpu_custom_call.1']
    #allocation4 [shape = 's32[2]{0}', space=sflag, size = 0x8, scoped, tag = 'scoped memory for tpu_custom_call.1']
    #allocation5 [shape = 'u8[32768]{0}', space=vmem, size = 0x8000, scoped, tag = 'input window, operand 5, single buffered']
    #allocation6 [shape = 's32[1]{0}', space=sflag, size = 0x4, scoped, tag = 'scoped memory for tpu_custom_call.1']
    #allocation7 [shape = 'u8[8192]{0}', space=vmem, size = 0x2000, scoped, tag = 'output window, operand 0']
    %12 = vsyncpa [#allocation3], 0
    %13 = vsyncpa [#allocation6], 0
    %14 = vsyncpa [#allocation4], 0
    %s15 = scalar_lea.sflag [#allocation4], 1
    %16 = vsyncpa %s15, 0
    loop: start=0, step=1, limit=4
    $region2: #{tpu_custom_call.1} parent=1 // loop_pre_header
      _
    $region3: #{tpu_custom_call.1} parent=1 // loop_header
      %s18 = sphi 0, %s22
      %p19 = scmp.ge.s32.totalorder %s18, 4
      %s28 = sphi 0, %s30
      %s31 = sphi 0, %s28
      %s32 = sphi 0, %s31
      %s48 = sphi 0, %s32
      %s52 = sphi 0, %s52
      %s54 = sphi 0, %s52
      %s55 = sphi 0, %s54
      %s69 = sphi 0, %s55
      %s73 = sphi 0, %s73
      %s75 = sphi 0, %s73
      %s76 = sphi 0, %s75
      %s90 = sphi 0, %s76
      %s94 = sphi 0, %s94
      %s96 = sphi 0, %s94
      %s97 = sphi 0, %s96
      %s111 = sphi 0, %s97
      %s115 = sphi 0, %s115
      %s117 = sphi 0, %s115
      %s118 = sphi 0, %s117
      %s132 = sphi 0, %s118
      %s136 = sphi 0, %s136
      %s138 = sphi 0, %s136
      %s139 = sphi 0, %s138
      %s153 = sphi 0, %s139
      %s157 = sphi 0, %s157
      %s159 = sphi 0, %s157
      %s160 = sphi 0, %s159
      %s174 = sphi 0, %s160
      %s180 = sphi 0, %s182
      %s183 = sphi 0, %s180
      %s184 = sphi 0, %s183
      %s200 = sphi 0, %s184
    $region4: #{tpu_custom_call.1} parent=1 // loop_header_branch
      %21 = sbr.rel (%p19) target = $region8
    $region5: #{tpu_custom_call.1} parent=1 // loop_body
      %s23 = ssub.s32 %s18, 1
      %s24 = ssub.s32 %s18, 2
      %s25 = sadd.s32 %s18, 1
      %s26 = ssub.s32 %s18, %s25
      %p27 = scmp.eq.s32.totalorder %s26, 0
      %s29 = sadd.s32 %s28, 1
      %s30 = scalar_select %p27, %s28, %s29
      %p33 = pneg %p27
      %p34 = scmp.eq.s32.totalorder %s18, 1
      %p35 = por %p33, %p34
      %p36 = scmp.ne.s32.totalorder %s28, %s31
      %p37 = scmp.eq.s32.totalorder %s18, 0
      %p38 = por %p36, %p37
      %p39 = scmp.ne.s32.totalorder %s28, %s31
      %p40 = scmp.eq.s32.totalorder %s23, 1
      %p41 = por %p39, %p40
      %p42 = scmp.ne.s32.totalorder %s31, %s32
      %p43 = scmp.eq.s32.totalorder %s23, 0
      %p44 = por %p42, %p43
      %p45 = scmp.ne.s32.totalorder %s31, %s32
      %p46 = scmp.eq.s32.totalorder %s24, 1
      %p47 = por %p45, %p46
      %p49 = scmp.ne.s32.totalorder %s32, %s48
      %p50 = scmp.eq.s32.totalorder %s24, 0
      %p51 = por %p49, %p50
      %s53 = sadd.s32 %s52, 1
      %p56 = scmp.eq.s32.totalorder %s18, 1
      %p57 = scmp.ne.s32.totalorder %s52, %s54
      %p58 = scmp.eq.s32.totalorder %s18, 0
      %p59 = por %p57, %p58
      %p60 = scmp.ne.s32.totalorder %s52, %s54
      %p61 = scmp.eq.s32.totalorder %s23, 1
      %p62 = por %p60, %p61
      %p63 = scmp.ne.s32.totalorder %s54, %s55
      %p64 = scmp.eq.s32.totalorder %s23, 0
      %p65 = por %p63, %p64
      %p66 = scmp.ne.s32.totalorder %s54, %s55
      %p67 = scmp.eq.s32.totalorder %s24, 1
      %p68 = por %p66, %p67
      %p70 = scmp.ne.s32.totalorder %s55, %s69
      %p71 = scmp.eq.s32.totalorder %s24, 0
      %p72 = por %p70, %p71
      %s74 = sadd.s32 %s73, 1
      %p77 = scmp.eq.s32.totalorder %s18, 1
      %p78 = scmp.ne.s32.totalorder %s73, %s75
      %p79 = scmp.eq.s32.totalorder %s18, 0
      %p80 = por %p78, %p79
      %p81 = scmp.ne.s32.totalorder %s73, %s75
      %p82 = scmp.eq.s32.totalorder %s23, 1
      %p83 = por %p81, %p82
      %p84 = scmp.ne.s32.totalorder %s75, %s76
      %p85 = scmp.eq.s32.totalorder %s23, 0
      %p86 = por %p84, %p85
      %p87 = scmp.ne.s32.totalorder %s75, %s76
      %p88 = scmp.eq.s32.totalorder %s24, 1
      %p89 = por %p87, %p88
      %p91 = scmp.ne.s32.totalorder %s76, %s90
      %p92 = scmp.eq.s32.totalorder %s24, 0
      %p93 = por %p91, %p92
      %s95 = sadd.s32 %s94, 1
      %p98 = scmp.eq.s32.totalorder %s18, 1
      %p99 = scmp.ne.s32.totalorder %s94, %s96
      %p100 = scmp.eq.s32.totalorder %s18, 0
      %p101 = por %p99, %p100
      %p102 = scmp.ne.s32.totalorder %s94, %s96
      %p103 = scmp.eq.s32.totalorder %s23, 1
      %p104 = por %p102, %p103
      %p105 = scmp.ne.s32.totalorder %s96, %s97
      %p106 = scmp.eq.s32.totalorder %s23, 0
      %p107 = por %p105, %p106
      %p108 = scmp.ne.s32.totalorder %s96, %s97
      %p109 = scmp.eq.s32.totalorder %s24, 1
      %p110 = por %p108, %p109
      %p112 = scmp.ne.s32.totalorder %s97, %s111
      %p113 = scmp.eq.s32.totalorder %s24, 0
      %p114 = por %p112, %p113
      %s116 = sadd.s32 %s115, 1
      %p119 = scmp.eq.s32.totalorder %s18, 1
      %p120 = scmp.ne.s32.totalorder %s115, %s117
      %p121 = scmp.eq.s32.totalorder %s18, 0
      %p122 = por %p120, %p121
      %p123 = scmp.ne.s32.totalorder %s115, %s117
      %p124 = scmp.eq.s32.totalorder %s23, 1
      %p125 = por %p123, %p124
      %p126 = scmp.ne.s32.totalorder %s117, %s118
      %p127 = scmp.eq.s32.totalorder %s23, 0
      %p128 = por %p126, %p127
      %p129 = scmp.ne.s32.totalorder %s117, %s118
      %p130 = scmp.eq.s32.totalorder %s24, 1
      %p131 = por %p129, %p130
      %p133 = scmp.ne.s32.totalorder %s118, %s132
      %p134 = scmp.eq.s32.totalorder %s24, 0
      %p135 = por %p133, %p134
      %s137 = sadd.s32 %s136, 1
      %p140 = scmp.eq.s32.totalorder %s18, 1
      %p141 = scmp.ne.s32.totalorder %s136, %s138
      %p142 = scmp.eq.s32.totalorder %s18, 0
      %p143 = por %p141, %p142
      %p144 = scmp.ne.s32.totalorder %s136, %s138
      %p145 = scmp.eq.s32.totalorder %s23, 1
      %p146 = por %p144, %p145
      %p147 = scmp.ne.s32.totalorder %s138, %s139
      %p148 = scmp.eq.s32.totalorder %s23, 0
      %p149 = por %p147, %p148
      %p150 = scmp.ne.s32.totalorder %s138, %s139
      %p151 = scmp.eq.s32.totalorder %s24, 1
      %p152 = por %p150, %p151
      %p154 = scmp.ne.s32.totalorder %s139, %s153
      %p155 = scmp.eq.s32.totalorder %s24, 0
      %p156 = por %p154, %p155
      %s158 = sadd.s32 %s157, 1
      %p161 = scmp.eq.s32.totalorder %s18, 1
      %p162 = scmp.ne.s32.totalorder %s157, %s159
      %p163 = scmp.eq.s32.totalorder %s18, 0
      %p164 = por %p162, %p163
      %p165 = scmp.ne.s32.totalorder %s157, %s159
      %p166 = scmp.eq.s32.totalorder %s23, 1
      %p167 = por %p165, %p166
      %p168 = scmp.ne.s32.totalorder %s159, %s160
      %p169 = scmp.eq.s32.totalorder %s23, 0
      %p170 = por %p168, %p169
      %p171 = scmp.ne.s32.totalorder %s159, %s160
      %p172 = scmp.eq.s32.totalorder %s24, 1
      %p173 = por %p171, %p172
      %p175 = scmp.ne.s32.totalorder %s160, %s174
      %p176 = scmp.eq.s32.totalorder %s24, 0
      %p177 = por %p175, %p176
      %s178 = ssub.s32 %s18, %s25
      %p179 = scmp.eq.s32.totalorder %s178, 0
      %s181 = sadd.s32 %s180, 1
      %s182 = scalar_select %p179, %s180, %s181
      %p185 = pneg %p179
      %p186 = scmp.eq.s32.totalorder %s18, 1
      %p187 = por %p185, %p186
      %p188 = scmp.ne.s32.totalorder %s180, %s183
      %p189 = scmp.eq.s32.totalorder %s18, 0
      %p190 = por %p188, %p189
      %p191 = scmp.ne.s32.totalorder %s180, %s183
      %p192 = scmp.eq.s32.totalorder %s23, 1
      %p193 = por %p191, %p192
      %p194 = scmp.ne.s32.totalorder %s183, %s184
      %p195 = scmp.eq.s32.totalorder %s23, 0
      %p196 = por %p194, %p195
      %p197 = scmp.ne.s32.totalorder %s183, %s184
      %p198 = scmp.eq.s32.totalorder %s24, 1
      %p199 = por %p197, %p198
      %p201 = scmp.ne.s32.totalorder %s184, %s200
      %p202 = scmp.eq.s32.totalorder %s24, 0
      %p203 = por %p201, %p202
      %p204 = scmp.le.s32.totalorder 1, %s18
      %p205 = scmp.lt.s32.totalorder %s18, 3
      %p206 = pnand %p204, %p205
      %p207 = pneg %p206
      // Predicated region
      $region9: #{tpu_custom_call.1} parent=5 // pred_check
        _
      $region10: #{tpu_custom_call.1} parent=5 // pred_check_branch
        %209 = sbr.rel (%p206) target = $region12
      $region11: #{tpu_custom_call.1} parent=5 // pred_region
        %s210 = ssub.s32 %s18, 1
        // Predicated region
        $region13: #{tpu_custom_call.1} parent=11 // pred_check
          %p211 = pneg %p65
        $region14: #{tpu_custom_call.1} parent=11 // pred_check_branch
          %213 = sbr.rel (%p211) target = $region16
        $region15: #{tpu_custom_call.1} parent=11 // pred_region
          _
        $region16: #{tpu_custom_call.1} parent=11 // pred_fallthru
          _
        // Predicated region
        $region17: #{tpu_custom_call.1} parent=11 // pred_check
          %p214 = pneg %p86
        $region18: #{tpu_custom_call.1} parent=11 // pred_check_branch
          %216 = sbr.rel (%p214) target = $region20
        $region19: #{tpu_custom_call.1} parent=11 // pred_region
          _
        $region20: #{tpu_custom_call.1} parent=11 // pred_fallthru
          _
        // Predicated region
        $region21: #{tpu_custom_call.1} parent=11 // pred_check
          %p217 = pneg %p107
        $region22: #{tpu_custom_call.1} parent=11 // pred_check_branch
          %219 = sbr.rel (%p217) target = $region24
        $region23: #{tpu_custom_call.1} parent=11 // pred_region
          %s221 = ssub.s32 1024, 1024
          %222 = vsyncadd [#allocation3], %s221
          %s223 = sshll.u32 [#allocation2], 4
          %s224 = int_to_ptr.vmem [resolvable:$true] %s223
          %229 = dma.hbm_to_vmem [thread:$0]  %s3, 1024, %s224, [#allocation3], 64, 64, 4
        $region24: #{tpu_custom_call.1} parent=11 // pred_fallthru
          _
        // Predicated region
        $region25: #{tpu_custom_call.1} parent=11 // pred_check
          %p230 = pneg %p128
        $region26: #{tpu_custom_call.1} parent=11 // pred_check_branch
          %232 = sbr.rel (%p230) target = $region28
        $region27: #{tpu_custom_call.1} parent=11 // pred_region
          _
        $region28: #{tpu_custom_call.1} parent=11 // pred_fallthru
          _
        // Predicated region
        $region29: #{tpu_custom_call.1} parent=11 // pred_check
          %p233 = pneg %p149
        $region30: #{tpu_custom_call.1} parent=11 // pred_check_branch
          %235 = sbr.rel (%p233) target = $region32
        $region31: #{tpu_custom_call.1} parent=11 // pred_region
          %s237 = ssub.s32 1024, 1024
          %238 = vsyncadd [#allocation6], %s237
          %s239 = sshll.u32 [#allocation5], 4
          %s240 = int_to_ptr.vmem [resolvable:$true] %s239
          %245 = dma.hbm_to_vmem [thread:$0]  %s5, 1024, %s240, [#allocation6], 64, 64, 4
        $region32: #{tpu_custom_call.1} parent=11 // pred_fallthru
          _
        // Predicated region
        $region33: #{tpu_custom_call.1} parent=11 // pred_check
          %p246 = pneg %p170
        $region34: #{tpu_custom_call.1} parent=11 // pred_check_branch
          %248 = sbr.rel (%p246) target = $region36
        $region35: #{tpu_custom_call.1} parent=11 // pred_region
          _
        $region36: #{tpu_custom_call.1} parent=11 // pred_fallthru
          _
      $region12: #{tpu_custom_call.1} parent=5 // pred_fallthru
        _
      %p249 = scmp.lt.s32.totalorder %s18, 2
      // Predicated region
      $region37: #{tpu_custom_call.1} parent=5 // pred_check
        %p250 = pneg %p249
      $region38: #{tpu_custom_call.1} parent=5 // pred_check_branch
        %252 = sbr.rel (%p250) target = $region40
      $region39: #{tpu_custom_call.1} parent=5 // pred_region
        // Predicated region
        $region41: #{tpu_custom_call.1} parent=39 // pred_check
          %p253 = pneg %p38
        $region42: #{tpu_custom_call.1} parent=39 // pred_check_branch
          %255 = sbr.rel (%p253) target = $region44
        $region43: #{tpu_custom_call.1} parent=39 // pred_region
          %p256 = scmp.lt.s32.totalorder %s18, 1
          %s257 = scalar_select %p256, %s18, 1
          %s258 = smul.addr %s257, 8
          %s259 = scalar_lea.vmem %s0, %s258
        $region44: #{tpu_custom_call.1} parent=39 // pred_fallthru
          _
      $region40: #{tpu_custom_call.1} parent=5 // pred_fallthru
        _
      %p260 = scmp.le.s32.totalorder 1, %s18
      %p261 = scmp.lt.s32.totalorder %s18, 3
      %p262 = pnand %p260, %p261
      %p263 = pneg %p262
      // Predicated region
      $region45: #{tpu_custom_call.1} parent=5 // pred_check
        _
      $region46: #{tpu_custom_call.1} parent=5 // pred_check_branch
        %265 = sbr.rel (%p262) target = $region48
      $region47: #{tpu_custom_call.1} parent=5 // pred_region
        %s266 = ssub.s32 %s18, 1
        // Predicated region
        $region49: #{tpu_custom_call.1} parent=47 // pred_check
          %p267 = pneg %p107
        $region50: #{tpu_custom_call.1} parent=47 // pred_check_branch
          %269 = sbr.rel (%p267) target = $region52
        $region51: #{tpu_custom_call.1} parent=47 // pred_region
          %270 = dma.done [#allocation3], 1024
        $region52: #{tpu_custom_call.1} parent=47 // pred_fallthru
          _
        // Predicated region
        $region53: #{tpu_custom_call.1} parent=47 // pred_check
          %p271 = pneg %p149
        $region54: #{tpu_custom_call.1} parent=47 // pred_check_branch
          %273 = sbr.rel (%p271) target = $region56
        $region55: #{tpu_custom_call.1} parent=47 // pred_region
          %274 = dma.done [#allocation6], 1024
        $region56: #{tpu_custom_call.1} parent=47 // pred_fallthru
          _
        %p275 = scmp.lt.s32.totalorder %s23, 1
        %s276 = scalar_select %p275, %s23, 1
        %s277 = smul.addr %s276, 8
        %s278 = scalar_lea.vmem %s0, %s277
        %p279 = pneg %p44
        %p280 = pneg %p41
        %p281 = pneg %p65
        %p282 = pneg %p62
        %p283 = pneg %p86
        %p284 = pneg %p83
        %p285 = pneg %p107
        %p286 = pneg %p104
        %p287 = pneg %p128
        %p288 = pneg %p125
        %p289 = pneg %p149
        %p290 = pneg %p146
        %p291 = pneg %p170
        %p292 = pneg %p167
        %p293 = pneg %p196
        %p294 = pneg %p193
        %s295 = sand.u32 %s183, 1
        %s296 = scalar_lea.sflag [#allocation4], %s295
        %s297 = sand.u32 %s183, 1
        %s298 = smul.addr %s297, 8
        %s299 = scalar_lea.vmem [#allocation7], %s298
        %p300 = scmp.lt.s32.totalorder %s23, 1
        %s301 = scalar_select %p300, %s23, 1
        %s302 = smul.addr %s301, 8
        %s303 = scalar_lea.vmem %s0, %s302
        %v305 = vld [vmem:[%s303] sm:$0xff]
        %v306 = vld [vmem:[%s1] sm:$0x1]
        %308 = vset.pattern.permute.xlu0 0
        %309 = vperm.xlu0 %308, %v305
        %v310 = vpop.permute.xlu0 %309
        %v313 = vlaneseq
        %v314 = vshrl.u32 %v313, 7
        %v315 = vsub.s32 0, %v314
        %v316 = vrot.slane %v306, %v315
        %v318 = vmul.f32 %v310, %v316
        %v319 = vld [vmem:[%s2] sm:$0x1]
        %v321 = vlaneseq
        %v322 = vshrl.u32 %v321, 7
        %v323 = vsub.s32 0, %v322
        %v324 = vrot.slane %v319, %v323
        %v326 = vadd.f32 %v318, %v324
        %v327 = vand.u32 2147483647, %v326
        %vm328 = vcmp.le.f32.partialorder %v327, 0.7853982
        %vm329 = vcmp.lt.s32.totalorder %v326, 0
        %v330 = vand.u32 %v326, 2139095040
        %v331 = vshrl.u32 %v330, 23
        %v332 = vsub.s32 %v331, 127
        %v333 = vand.u32 2147483647, %v326
        %v334 = vand.u32 %v333, 8388607
        %v335 = vor.u32 %v334, 8388608
        %v336 = vsub.s32 0, %v335
        %v337 = vadd.s32 %v332, 1
        %vm338 = vcmp.gt.s32.totalorder %v337, 0
        %v339 = vsel %vm338, %v337, 0
        %v340 = vshrl.u32 %v339, 5
        %v341 = vand.u32 %v339, 31
        %v342 = vsub.s32 32, %v341
        %v343 = vshrl.u32 683565275, %v342
        %v344 = vshll.u32 683565275, %v341
        %v345 = vshrl.u32 2475754826, %v342
        %v346 = vor.u32 %v344, %v345
        %v347 = vshll.u32 2475754826, %v341
        %v348 = vshrl.u32 2131351028, %v342
        %v349 = vor.u32 %v347, %v348
        %v350 = vshll.u32 2131351028, %v341
        %v351 = vshrl.u32 2102212464, %v342
        %v352 = vor.u32 %v350, %v351
        %v353 = vshll.u32 2102212464, %v341
        %v354 = vshrl.u32 920167782, %v342
        %v355 = vor.u32 %v353, %v354
        %v356 = vshll.u32 920167782, %v341
        %v357 = vshrl.u32 1326507024, %v342
        %v358 = vor.u32 %v356, %v357
        %vm359 = vcmp.lt.s32.totalorder %v340, 1
        %vm360 = vcmp.lt.s32.totalorder %v340, 2
        %vm361 = vcmp.lt.s32.totalorder %v340, 3
        %vm362 = vcmp.lt.s32.totalorder %v340, 4
        %v363 = vsel %vm359, %v343, %v346
        %v364 = vsel %vm362, %v352, 2102212464
        %v365 = vsel %vm361, %v349, %v364
        %v366 = vsel %vm360, %v363, %v365
        %v367 = vsel %vm359, %v346, %v349
        %v368 = vsel %vm362, %v355, 920167782
        %v369 = vsel %vm361, %v352, %v368
        %v370 = vsel %vm360, %v367, %v369
        %v371 = vsel %vm359, %v349, %v352
        %v372 = vsel %vm362, %v358, 1326507024
        %v373 = vsel %vm361, %v355, %v372
        %v374 = vsel %vm360, %v371, %v373
        %v375 = vshll.u32 %v335, 8
        %v376 = vmul.u32.u64.compose %v375, %v374
        %v377 = vextract.low.u32 %v376
        %v378 = vextract.high.u32 %v376
        %v379 = vmul.u32.u64.compose %v375, %v370
        %v380 = vextract.low.u32 %v379
        %v381 = vextract.high.u32 %v379
        %v382 = vmul.u32 %v375, %v366
        %v383 = vadd.s32 %v378, %v380
        %vm384 = vc.u32 %v378, %v380
        %v385 = vadd.s32 %v381, 1
        %v386 = vsel %vm384, %v385, %v381
        %v387 = vadd.s32 %v382, %v386
        %v388 = vadd.s32 %v387, 536870912
        %v389 = vshrl.u32 %v388, 30
        %v390 = vshll.u32 %v389, 30
        %v391 = vsub.s32 %v387, %v390
        %vm392 = vcmp.lt.s32.totalorder %v391, 0
        %v393 = vsub.s32 0, %v391
        %v394 = vsel %vm392, %v393, %v391
        %v395 = vclz %v394
        %v396 = vsub.s32 %v395, 2
        %vm397 = vcmp.gt.s32.totalorder 0, %v396
        %v398 = vsel %vm397, 0, %v396
        %v399 = vsub.s32 32, %v398
        %v400 = vshll.u32 %v391, %v398
        %v401 = vshrl.u32 %v383, %v399
        %v402 = vor.u32 %v400, %v401
        %v403 = vsub.s32 4294967266, %v398
        %v404 = vadd.s32 %v403, 127
        %v405 = vshll.u32 %v404, 23
        %v406 = vor.u32 4788187, %v405
        %v407 = vand.u32 2147483647, %v406
        %v409 = vcvt.s32.f32 %v402
        %v410 = vmul.f32 %v409, %v407
        %v411 = vxor.u32 %v410, 2147483648
        %v412 = vsel %vm329, %v411, %v410
        %v413 = vsub.s32 4, %v389
        %v414 = vsel %vm329, %v413, %v389
        %v415 = vsel %vm328, %v326, %v412
        %v416 = vsel %vm328, 0, %v414
        %v417 = vcosq.f32.pop %v415
        %v418 = vsinq.f32.pop %v415
        %vm419 = vweird.f32 %v326
        %v420 = vadd.s32 %v416, 3
        %v421 = vand.u32 %v420, 3
        %vm422 = vcmp.lt.s32.totalorder %v421, 2
        %vm423 = vcmp.eq.s32.totalorder %v421, 0
        %v424 = vxor.u32 %v418, 2147483648
        %v425 = vsel %vm423, %v417, %v424
        %vm426 = vcmp.eq.s32.totalorder %v421, 2
        %v427 = vxor.u32 %v417, 2147483648
        %v428 = vsel %vm426, %v427, %v418
        %v429 = vsel %vm422, %v425, %v428
        %v430 = vsel %vm419, nan, %v429
        %v431 = vpack.c.bf16 %v430, %v430
        %v432 = vld [vmem:[#allocation2] sm:$0xf]
        %v433 = vld [vmem:[#allocation2 + $0x4] sm:$0xf]
        %v434 = vld [vmem:[#allocation2 + $0x8] sm:$0xf]
        %v435 = vld [vmem:[#allocation2 + $0xc] sm:$0xf]
        %v436 = vld [vmem:[#allocation2 + $0x10] sm:$0xf]
        %v437 = vld [vmem:[#allocation2 + $0x14] sm:$0xf]
        %v438 = vld [vmem:[#allocation2 + $0x18] sm:$0xf]
        %v439 = vld [vmem:[#allocation2 + $0x1c] sm:$0xf]
        %v440 = vld [vmem:[#allocation2 + $0x20] sm:$0xf]
        %v441 = vld [vmem:[#allocation2 + $0x24] sm:$0xf]
        %v442 = vld [vmem:[#allocation2 + $0x28] sm:$0xf]
        %v443 = vld [vmem:[#allocation2 + $0x2c] sm:$0xf]
        %v444 = vld [vmem:[#allocation2 + $0x30] sm:$0xf]
        %v445 = vld [vmem:[#allocation2 + $0x34] sm:$0xf]
        %v446 = vld [vmem:[#allocation2 + $0x38] sm:$0xf]
        %v447 = vld [vmem:[#allocation2 + $0x3c] sm:$0xf]
        %v448 = vld [vmem:[%s4] sm:$0x1]
        %v450 = vlaneseq
        %v451 = vshrl.u32 %v450, 7
        %v452 = vsub.s32 0, %v451
        %v453 = vrot.slane %v448, %v452
        %v471 = vunpack.c.l.b16 %v432
        %v472 = vunpack.c.l.b16 %v433
        %v473 = vunpack.c.l.b16 %v434
        %v474 = vunpack.c.l.b16 %v435
        %v475 = vunpack.c.l.b16 %v436
        %v476 = vunpack.c.l.b16 %v437
        %v477 = vunpack.c.l.b16 %v438
        %v478 = vunpack.c.l.b16 %v439
        %v479 = vunpack.c.l.b16 %v440
        %v480 = vunpack.c.l.b16 %v441
        %v481 = vunpack.c.l.b16 %v442
        %v482 = vunpack.c.l.b16 %v443
        %v483 = vunpack.c.l.b16 %v444
        %v484 = vunpack.c.l.b16 %v445
        %v485 = vunpack.c.l.b16 %v446
        %v486 = vunpack.c.l.b16 %v447
        %v487 = vpack.c.b16 %v472, %v471
        %v488 = vpack.c.b16 %v474, %v473
        %v489 = vpack.c.b16 %v476, %v475
        %v490 = vpack.c.b16 %v478, %v477
        %v491 = vpack.c.b16 %v480, %v479
        %v492 = vpack.c.b16 %v482, %v481
        %v493 = vpack.c.b16 %v484, %v483
        %v494 = vpack.c.b16 %v486, %v485
        %503 = vmatprep.subr.bf16.mxu0 0
        %504 = vmatpush1.bf16.msra.mxu0 %v494
        %505 = vmatprep.subr.bf16.mxu0 0
        %506 = vmatpush1.bf16.msra.mxu0 %v493
        %507 = vmatprep.subr.bf16.mxu0 0
        %508 = vmatpush1.bf16.msra.mxu0 %v492
        %509 = vmatprep.subr.bf16.mxu0 0
        %510 = vmatpush1.bf16.msra.mxu0 %v491
        %511 = vmatprep.subr.bf16.mxu0 0
        %512 = vmatpush1.bf16.msra.mxu0 %v490
        %513 = vmatprep.subr.bf16.mxu0 0
        %514 = vmatpush1.bf16.msra.mxu0 %v489
        %515 = vmatprep.subr.bf16.mxu0 0
        %516 = vmatpush1.bf16.msra.mxu0 %v488
        %517 = vmatprep.subr.bf16.mxu0 0
        %518 = vmatpush1.bf16.msra.mxu0 %v487
        %519 = vmatprep.subr.bf16.mxu0 0
        %520 = vmatpush2.bf16.msra.mxu0 0
        %521 = vmatprep.subr.bf16.mxu0 0
        %522 = vmatpush2.bf16.msra.mxu0 0
        %523 = vmatprep.subr.bf16.mxu0 0
        %524 = vmatpush2.bf16.msra.mxu0 0
        %525 = vmatprep.subr.bf16.mxu0 0
        %526 = vmatpush2.bf16.msra.mxu0 0
        %527 = vmatprep.subr.bf16.mxu0 0
        %528 = vmatpush2.bf16.msra.mxu0 0
        %529 = vmatprep.subr.bf16.mxu0 0
        %530 = vmatpush2.bf16.msra.mxu0 0
        %531 = vmatprep.subr.bf16.mxu0 0
        %532 = vmatpush2.bf16.msra.mxu0 0
        %533 = vmatprep.subr.bf16.mxu0 0
        %534 = vmatpush2.bf16.msra.mxu0 0
        %535 = vmatprep.mubr.bf16.mxu0 0
        %536 = vmatmul.mubr.bf16.gmra.mxu0 %v431
        %v537 = vpop.f32.mrf.mxu0
        %v538 = vadd.f32 %v453, %v537
        %v539 = vpop.f32.mrf.mxu0
        %v540 = vpop.f32.mrf.mxu0
        %v541 = vpop.f32.mrf.mxu0
        %542 = vdwg.mxu0
        %v543 = vxor.u32 %v538, 2147483648
        %v544 = vmul.f32 %v543, 1.442695
        %v545 = vpow.pop %v544
        %v546 = vadd.f32 %v545, 1.0
        %v547 = vrcp.pop %v546
        %v548 = vmul.f32 1.0, %v547
        %v549 = vmul.f32 %v538, %v548
        %v550 = vpack.c.bf16 %v549, %v549
        %v551 = vld [vmem:[#allocation5] sm:$0xf]
        %v552 = vld [vmem:[#allocation5 + $0x4] sm:$0xf]
        %v553 = vld [vmem:[#allocation5 + $0x8] sm:$0xf]
        %v554 = vld [vmem:[#allocation5 + $0xc] sm:$0xf]
        %v555 = vld [vmem:[#allocation5 + $0x10] sm:$0xf]
        %v556 = vld [vmem:[#allocation5 + $0x14] sm:$0xf]
        %v557 = vld [vmem:[#allocation5 + $0x18] sm:$0xf]
        %v558 = vld [vmem:[#allocation5 + $0x1c] sm:$0xf]
        %v559 = vld [vmem:[#allocation5 + $0x20] sm:$0xf]
        %v560 = vld [vmem:[#allocation5 + $0x24] sm:$0xf]
        %v561 = vld [vmem:[#allocation5 + $0x28] sm:$0xf]
        %v562 = vld [vmem:[#allocation5 + $0x2c] sm:$0xf]
        %v563 = vld [vmem:[#allocation5 + $0x30] sm:$0xf]
        %v564 = vld [vmem:[#allocation5 + $0x34] sm:$0xf]
        %v565 = vld [vmem:[#allocation5 + $0x38] sm:$0xf]
        %v566 = vld [vmem:[#allocation5 + $0x3c] sm:$0xf]
        %v567 = vld [vmem:[%s6] sm:$0x1]
        %v569 = vlaneseq
        %v570 = vshrl.u32 %v569, 7
        %v571 = vsub.s32 0, %v570
        %v572 = vrot.slane %v567, %v571
        %v590 = vunpack.c.l.b16 %v551
        %v591 = vunpack.c.l.b16 %v552
        %v592 = vunpack.c.l.b16 %v553
        %v593 = vunpack.c.l.b16 %v554
        %v594 = vunpack.c.l.b16 %v555
        %v595 = vunpack.c.l.b16 %v556
        %v596 = vunpack.c.l.b16 %v557
        %v597 = vunpack.c.l.b16 %v558
        %v598 = vunpack.c.l.b16 %v559
        %v599 = vunpack.c.l.b16 %v560
        %v600 = vunpack.c.l.b16 %v561
        %v601 = vunpack.c.l.b16 %v562
        %v602 = vunpack.c.l.b16 %v563
        %v603 = vunpack.c.l.b16 %v564
        %v604 = vunpack.c.l.b16 %v565
        %v605 = vunpack.c.l.b16 %v566
        %v606 = vpack.c.b16 %v591, %v590
        %v607 = vpack.c.b16 %v593, %v592
        %v608 = vpack.c.b16 %v595, %v594
        %v609 = vpack.c.b16 %v597, %v596
        %v610 = vpack.c.b16 %v599, %v598
        %v611 = vpack.c.b16 %v601, %v600
        %v612 = vpack.c.b16 %v603, %v602
        %v613 = vpack.c.b16 %v605, %v604
        %622 = vmatprep.subr.bf16.mxu0 0
        %623 = vmatpush1.bf16.msra.mxu0 %v613
        %624 = vmatprep.subr.bf16.mxu0 0
        %625 = vmatpush1.bf16.msra.mxu0 %v612
        %626 = vmatprep.subr.bf16.mxu0 0
        %627 = vmatpush1.bf16.msra.mxu0 %v611
        %628 = vmatprep.subr.bf16.mxu0 0
        %629 = vmatpush1.bf16.msra.mxu0 %v610
        %630 = vmatprep.subr.bf16.mxu0 0
        %631 = vmatpush1.bf16.msra.mxu0 %v609
        %632 = vmatprep.subr.bf16.mxu0 0
        %633 = vmatpush1.bf16.msra.mxu0 %v608
        %634 = vmatprep.subr.bf16.mxu0 0
        %635 = vmatpush1.bf16.msra.mxu0 %v607
        %636 = vmatprep.subr.bf16.mxu0 0
        %637 = vmatpush1.bf16.msra.mxu0 %v606
        %638 = vmatprep.subr.bf16.mxu0 0
        %639 = vmatpush2.bf16.msra.mxu0 0
        %640 = vmatprep.subr.bf16.mxu0 0
        %641 = vmatpush2.bf16.msra.mxu0 0
        %642 = vmatprep.subr.bf16.mxu0 0
        %643 = vmatpush2.bf16.msra.mxu0 0
        %644 = vmatprep.subr.bf16.mxu0 0
        %645 = vmatpush2.bf16.msra.mxu0 0
        %646 = vmatprep.subr.bf16.mxu0 0
        %647 = vmatpush2.bf16.msra.mxu0 0
        %648 = vmatprep.subr.bf16.mxu0 0
        %649 = vmatpush2.bf16.msra.mxu0 0
        %650 = vmatprep.subr.bf16.mxu0 0
        %651 = vmatpush2.bf16.msra.mxu0 0
        %652 = vmatprep.subr.bf16.mxu0 0
        %653 = vmatpush2.bf16.msra.mxu0 0
        %654 = vmatprep.mubr.bf16.mxu0 0
        %655 = vmatmul.mubr.bf16.gmra.mxu0 %v550
        %v656 = vpop.f32.mrf.mxu0
        %v657 = vadd.f32 %v572, %v656
        %v658 = vpop.f32.mrf.mxu0
        %v659 = vpop.f32.mrf.mxu0
        %v660 = vpop.f32.mrf.mxu0
        %661 = vdwg.mxu0
        %662 = vst [vmem:[%s299] sm:$0xff] %v657
        %s663 = sand.u32 %s183, 1
        %s664 = scalar_lea.sflag [#allocation4], %s663
        %s665 = sand.u32 %s183, 1
        %s666 = smul.addr %s665, 8
        %s667 = scalar_lea.vmem [#allocation7], %s666
        // Predicated region
        $region57: #{tpu_custom_call.1} parent=47 // pred_check
          %p668 = pneg %p193
        $region58: #{tpu_custom_call.1} parent=47 // pred_check_branch
          %670 = sbr.rel (%p668) target = $region60
        $region59: #{tpu_custom_call.1} parent=47 // pred_region
          %s672 = ssub.s32 128, 128
          %673 = vsyncadd %s664, %s672
          %s674 = smul.addr %s23, 128
          %s675 = scalar_lea.hbm %s7, %s674
          %s677 = sshll.u32 %s667, 4
          %s678 = int_to_ptr.vmem [resolvable:$true] %s677
          %680 = dma.vmem_to_hbm [thread:$0]  %s678, 128, %s675, %s664
        $region60: #{tpu_custom_call.1} parent=47 // pred_fallthru
          _
      $region48: #{tpu_custom_call.1} parent=5 // pred_fallthru
        _
      %p681 = scmp.le.s32.totalorder 2, %s18
      // Predicated region
      $region61: #{tpu_custom_call.1} parent=5 // pred_check
        %p682 = pneg %p681
      $region62: #{tpu_custom_call.1} parent=5 // pred_check_branch
        %684 = sbr.rel (%p682) target = $region64
      $region63: #{tpu_custom_call.1} parent=5 // pred_region
        %s685 = ssub.s32 %s18, 2
        // Predicated region
        $region65: #{tpu_custom_call.1} parent=63 // pred_check
          %p686 = pneg %p199
        $region66: #{tpu_custom_call.1} parent=63 // pred_check_branch
          %688 = sbr.rel (%p686) target = $region68
        $region67: #{tpu_custom_call.1} parent=63 // pred_region
          %s689 = sand.u32 %s184, 1
          %s690 = scalar_lea.sflag [#allocation4], %s689
          %s691 = sand.u32 %s184, 1
          %s692 = smul.addr %s691, 8
          %s693 = scalar_lea.vmem [#allocation7], %s692
          %694 = dma.done %s690, 128
        $region68: #{tpu_custom_call.1} parent=63 // pred_fallthru
          _
      $region64: #{tpu_custom_call.1} parent=5 // pred_fallthru
        _
    $region6: #{tpu_custom_call.1} parent=1 // loop_footer
      %s22 = sadd.s32 1, %s18
    $region7: #{tpu_custom_call.1} parent=1 // loop_footer_branch
      %17 = sbr.rel target = $region3
    $region8: #{tpu_custom_call.1} parent=1 // loop_exit
      _
    %695 = vsyncpa [#allocation3], 1
    %s696 = scalar_lea.sflag [#allocation3], 1
    %697 = vsyncpa %s696, 1
    %698 = vsyncpa [#allocation6], 1
    %699 = vsyncpa [#allocation4], 1
    %s700 = scalar_lea.sflag [#allocation4], 1
    %701 = vsyncpa %s700, 1

</llo_original>
